<compile_context>
chip_gen: v6e
topology: v6e:2x2x1
jax: 0.10.0
libtpu: 0.0.40
codegen_flags: <defaults>
</compile_context>

<pallas_src>
import functools

import jax
import jax.numpy as jnp
from jax.experimental import pallas as pl
from jax.experimental.pallas import tpu as pltpu

LAYER_SIZES = [2, 40, 40, 40, 40, 40, 40, 40, 3]
NUM_LAYERS = len(LAYER_SIZES) - 1          # 8 linear layers
IN_DIM = LAYER_SIZES[0]                    # 2
OUT_DIM = LAYER_SIZES[-1]                  # 3
HIDDEN = LAYER_SIZES[1]                    # 40
PACK = 3                                   # logical samples per physical row
GROUP = HIDDEN                             # lane stride between packed samples
FEAT_PAD = 128                             # lane-aligned packed feature width
IN_COLS = PACK * IN_DIM                    # 6 packed input columns
OUT_LANES = 16                             # narrow packed output width (9 used)
DEFAULT_TILE_M = 512                       # physical rows per grid step


def _mlp_kernel(x_ref, w_ref, b_ref, o_ref):
    """Full packed-MLP forward for one batch tile.

    x_ref: (tile, 6)   f32   3 packed samples per row (cols 2k, 2k+1)
    w_ref: (8,128,128) bf16  block-diagonal padded W^T per layer (resident)
    b_ref: (8,128)     f32   lane-tiled padded biases (resident)
    o_ref: (tile, 16)  f32   packed outputs: sample k at cols 3k..3k+2
    """
    x = x_ref[...].astype(jnp.float32)                     # (tile, 6)

    # ---- layer 0 on the VPU: 6 packed input columns -> outer-product FMAs.
    w0 = w_ref[0]                                          # (128, 128) bf16
    z = b_ref[pl.ds(0, 1), :]                              # (1, 128) f32
    for r in range(IN_COLS):                               # static unroll (6)
        z = z + x[:, r:r + 1] * w0[r:r + 1, :].astype(jnp.float32)
    h = jnp.tanh(z).astype(jnp.bfloat16)                   # bf16 carried value

    # ---- hidden layers 1..6: bf16 MXU matmul, f32 accumulate/bias/tanh.
    # jnp.tanh lowers to the native EUP tanh (single transcendental per lane).
    for i in range(1, NUM_LAYERS - 1):                     # static unroll (6)
        z = jnp.dot(h, w_ref[i], preferred_element_type=jnp.float32)
        h = jnp.tanh(z + b_ref[pl.ds(i, 1), :]).astype(jnp.bfloat16)

    # ---- final linear layer (no activation); packed outputs sit in lanes 0-8.
    last = NUM_LAYERS - 1
    z = jnp.dot(h, w_ref[last], preferred_element_type=jnp.float32)
    z = z + b_ref[pl.ds(last, 1), :]
    o_ref[...] = z[:, :OUT_LANES].astype(o_ref.dtype)


@functools.partial(jax.jit, static_argnames=("tile_m",))
def pinn_forward(x, w_stack, b_stack, *, tile_m=DEFAULT_TILE_M):
    """x: (N, 2) float32 -> (N, 3) float32."""
    n, in_dim = x.shape
    assert in_dim == IN_DIM

    # Pack 3 samples per physical row.
    n_rows = -(-n // PACK)
    x_pack = jnp.pad(x.astype(jnp.float32), ((0, n_rows * PACK - n), (0, 0)))
    x_pack = x_pack.reshape(n_rows, IN_COLS)

    # Batch tile: multiple of 8 sublanes; cap at half the batch so the grid has
    # >= 2 steps (keeps both v7x TensorCores busy for small batches).
    rows8 = pl.cdiv(n_rows, 8) * 8
    half = max(8, pl.cdiv(pl.cdiv(rows8, 2), 8) * 8)
    tile = min(tile_m, half)
    n_pad = pl.cdiv(n_rows, tile) * tile
    x_pack = jnp.pad(x_pack, ((0, n_pad - n_rows), (0, 0)))

    grid = (n_pad // tile,)
    cost = pl.CostEstimate(
        flops=2 * n_pad * FEAT_PAD * FEAT_PAD * (NUM_LAYERS - 1)
              + 2 * n_pad * IN_COLS * FEAT_PAD,
        transcendentals=(NUM_LAYERS - 1) * n_pad * FEAT_PAD,
        bytes_accessed=n_pad * (IN_COLS + OUT_LANES) * 4
                       + w_stack.size * 2 + b_stack.size * 4,
    )

    out = pl.pallas_call(
        _mlp_kernel,
        out_shape=jax.ShapeDtypeStruct((n_pad, OUT_LANES), jnp.float32),
        grid_spec=pltpu.PrefetchScalarGridSpec(
            num_scalar_prefetch=0,
            grid=grid,
            in_specs=[
                # Narrow input block: last dim == full array dim (6), so the
                # (8,128) divisibility rule does not apply.
                pl.BlockSpec((tile, IN_COLS), lambda m: (m, 0)),
                # Weights/biases: constant block index -> resident in VMEM,
                # not re-fetched per grid step (verified in the Mosaic MLIR of
                # the previous run; pl.Buffered(1) not needed).
                pl.BlockSpec((NUM_LAYERS, FEAT_PAD, FEAT_PAD),
                             lambda m: (0, 0, 0)),
                pl.BlockSpec((NUM_LAYERS, FEAT_PAD), lambda m: (0, 0)),
            ],
            out_specs=pl.BlockSpec((tile, OUT_LANES), lambda m: (m, 0)),
        ),
        compiler_params=pltpu.CompilerParams(
            dimension_semantics=("parallel",)),
        cost_estimate=cost,
    )(x_pack, w_stack, b_stack)

    # Un-pack: physical row r, cols 3k..3k+2  ->  logical sample 3r + k.
    out = out[:n_rows, :PACK * OUT_DIM].reshape(n_rows, PACK, OUT_DIM)
    return out.reshape(n_rows * PACK, OUT_DIM)[:n, :]


def _pack_params(ws, bs):
    """Block-diagonal 3x packing of PyTorch-layout (out,in) weights."""
    w_stack = jnp.zeros((NUM_LAYERS, FEAT_PAD, FEAT_PAD), jnp.float32)
    b_stack = jnp.zeros((NUM_LAYERS, FEAT_PAD), jnp.float32)
    for i in range(NUM_LAYERS):
        w_t = ws[i].T                                   # (fan_in, fan_out)
        fan_in, fan_out = w_t.shape
        for k in range(PACK):
            if i == 0:
                # input rows 2k..2k+1 -> hidden lane group 40k..40k+39
                w_stack = w_stack.at[i, IN_DIM * k:IN_DIM * (k + 1),
                                     GROUP * k:GROUP * k + fan_out].set(w_t)
                b_stack = b_stack.at[i, GROUP * k:GROUP * k + fan_out].set(bs[i])
            elif i < NUM_LAYERS - 1:
                # hidden block-diagonal 40x40
                w_stack = w_stack.at[i, GROUP * k:GROUP * k + fan_in,
                                     GROUP * k:GROUP * k + fan_out].set(w_t)
                b_stack = b_stack.at[i, GROUP * k:GROUP * k + fan_out].set(bs[i])
            else:
                # last layer: pack 3-wide output groups at lanes 3k..3k+2
                w_stack = w_stack.at[i, GROUP * k:GROUP * k + fan_in,
                                     OUT_DIM * k:OUT_DIM * (k + 1)].set(w_t)
                b_stack = b_stack.at[i, OUT_DIM * k:OUT_DIM * (k + 1)].set(bs[i])
    return w_stack.astype(jnp.bfloat16), b_stack        # weights bf16, bias f32


def init_params(key):
    """Deterministic PyTorch-style init; returns packed stacks + raw params."""
    ws, bs = [], []
    for i in range(NUM_LAYERS):
        fan_in, fan_out = LAYER_SIZES[i], LAYER_SIZES[i + 1]
        key, kw, kb = jax.random.split(key, 3)
        bound = 1.0 / (fan_in ** 0.5)
        w = jax.random.uniform(kw, (fan_out, fan_in), jnp.float32, -bound, bound)
        b = jax.random.uniform(kb, (fan_out,), jnp.float32, -bound, bound)
        ws.append(w)
        bs.append(b)
    w_stack, b_stack = _pack_params(ws, bs)
    return w_stack, b_stack, ws, bs


def reference_forward(x, ws, bs):
    h = x.astype(jnp.float32)
    for i in range(NUM_LAYERS):
        h = h @ ws[i].T + bs[i]
        if i < NUM_LAYERS - 1:
            h = jnp.tanh(h)
    return h


if __name__ == "__main__":
    key = jax.random.PRNGKey(0)
    k_params, k_x = jax.random.split(key)

    w_stack, b_stack, ws, bs = init_params(k_params)

    N = 64                                      # small batch of (x, t) points
    x = jax.random.normal(k_x, (N, IN_DIM), jnp.float32)

    out = pinn_forward(x, w_stack, b_stack)
    out = jax.block_until_ready(out)

    ref = reference_forward(x, ws, bs)
    assert out.shape == (N, OUT_DIM)
    err = float(jnp.max(jnp.abs(out - ref)))
    # bf16 matmul operands / bf16 weights with f32 accumulation vs f32 ref.
    assert err < 5e-2, err

    print("KERNEL_OK")
</pallas_src>

<mosaic_0001>
module attributes {stable_mosaic.version = 11 : i64} {
  func.func @_mlp_kernel(%arg0: i32, %arg1: memref<16x6xf32, #tpu.memory_space<vmem>>, %arg2: memref<8x128x128xbf16, #tpu.memory_space<vmem>>, %arg3: memref<8x128xf32, #tpu.memory_space<vmem>>, %arg4: memref<16x16xf32, #tpu.memory_space<vmem>>) attributes {dimension_semantics = [#tpu.dimension_semantics<parallel>], iteration_bounds = array<i64: 2>, scalar_prefetch = 0 : i64, scratch_operands = 0 : i64, tpu.core_type = #tpu.core_type<tc>, window_params = [{transform_indices = @transform_0, window_bounds = array<i64: 16, 6>}, {pipeline_mode = #tpu.pipeline_mode<synchronous>, transform_indices = @transform_1, window_bounds = array<i64: 8, 128, 128>}, {pipeline_mode = #tpu.pipeline_mode<synchronous>, transform_indices = @transform_2, window_bounds = array<i64: 8, 128>}, {transform_indices = @transform_3, window_bounds = array<i64: 16, 16>}]} {
    %c0 = arith.constant 0 : index
    %c0_0 = arith.constant 0 : index
    %0 = vector.load %arg1[%c0, %c0_0] : memref<16x6xf32, #tpu.memory_space<vmem>>, vector<16x6xf32>
    %c0_1 = arith.constant 0 : index
    %c0_2 = arith.constant 0 : index
    %c0_3 = arith.constant 0 : index
    %1 = vector.load %arg2[%c0_1, %c0_2, %c0_3] : memref<8x128x128xbf16, #tpu.memory_space<vmem>>, vector<1x128x128xbf16>
    %2 = vector.shape_cast %1 : vector<1x128x128xbf16> to vector<128x128xbf16>
    %c0_4 = arith.constant 0 : index
    %c0_5 = arith.constant 0 : index
    %3 = vector.load %arg3[%c0_4, %c0_5] : memref<8x128xf32, #tpu.memory_space<vmem>>, vector<1x128xf32>
    %4 = vector.extract_strided_slice %0 {offsets = [0, 0], sizes = [16, 1], strides = [1, 1]} : vector<16x6xf32> to vector<16x1xf32>
    %5 = vector.extract_strided_slice %2 {offsets = [0, 0], sizes = [1, 128], strides = [1, 1]} : vector<128x128xbf16> to vector<1x128xbf16>
    %6 = arith.extf %5 : vector<1x128xbf16> to vector<1x128xf32>
    %7 = vector.broadcast %4 : vector<16x1xf32> to vector<16x128xf32>
    %8 = vector.broadcast %6 : vector<1x128xf32> to vector<16x128xf32>
    %9 = arith.mulf %7, %8 : vector<16x128xf32>
    %10 = vector.broadcast %3 : vector<1x128xf32> to vector<16x128xf32>
    %11 = arith.addf %10, %9 : vector<16x128xf32>
    %12 = vector.extract_strided_slice %0 {offsets = [0, 1], sizes = [16, 1], strides = [1, 1]} : vector<16x6xf32> to vector<16x1xf32>
    %13 = vector.extract_strided_slice %2 {offsets = [1, 0], sizes = [1, 128], strides = [1, 1]} : vector<128x128xbf16> to vector<1x128xbf16>
    %14 = arith.extf %13 : vector<1x128xbf16> to vector<1x128xf32>
    %15 = vector.broadcast %12 : vector<16x1xf32> to vector<16x128xf32>
    %16 = vector.broadcast %14 : vector<1x128xf32> to vector<16x128xf32>
    %17 = arith.mulf %15, %16 : vector<16x128xf32>
    %18 = arith.addf %11, %17 : vector<16x128xf32>
    %19 = vector.extract_strided_slice %0 {offsets = [0, 2], sizes = [16, 1], strides = [1, 1]} : vector<16x6xf32> to vector<16x1xf32>
    %20 = vector.extract_strided_slice %2 {offsets = [2, 0], sizes = [1, 128], strides = [1, 1]} : vector<128x128xbf16> to vector<1x128xbf16>
    %21 = arith.extf %20 : vector<1x128xbf16> to vector<1x128xf32>
    %22 = vector.broadcast %19 : vector<16x1xf32> to vector<16x128xf32>
    %23 = vector.broadcast %21 : vector<1x128xf32> to vector<16x128xf32>
    %24 = arith.mulf %22, %23 : vector<16x128xf32>
    %25 = arith.addf %18, %24 : vector<16x128xf32>
    %26 = vector.extract_strided_slice %0 {offsets = [0, 3], sizes = [16, 1], strides = [1, 1]} : vector<16x6xf32> to vector<16x1xf32>
    %27 = vector.extract_strided_slice %2 {offsets = [3, 0], sizes = [1, 128], strides = [1, 1]} : vector<128x128xbf16> to vector<1x128xbf16>
    %28 = arith.extf %27 : vector<1x128xbf16> to vector<1x128xf32>
    %29 = vector.broadcast %26 : vector<16x1xf32> to vector<16x128xf32>
    %30 = vector.broadcast %28 : vector<1x128xf32> to vector<16x128xf32>
    %31 = arith.mulf %29, %30 : vector<16x128xf32>
    %32 = arith.addf %25, %31 : vector<16x128xf32>
    %33 = vector.extract_strided_slice %0 {offsets = [0, 4], sizes = [16, 1], strides = [1, 1]} : vector<16x6xf32> to vector<16x1xf32>
    %34 = vector.extract_strided_slice %2 {offsets = [4, 0], sizes = [1, 128], strides = [1, 1]} : vector<128x128xbf16> to vector<1x128xbf16>
    %35 = arith.extf %34 : vector<1x128xbf16> to vector<1x128xf32>
    %36 = vector.broadcast %33 : vector<16x1xf32> to vector<16x128xf32>
    %37 = vector.broadcast %35 : vector<1x128xf32> to vector<16x128xf32>
    %38 = arith.mulf %36, %37 : vector<16x128xf32>
    %39 = arith.addf %32, %38 : vector<16x128xf32>
    %40 = vector.extract_strided_slice %0 {offsets = [0, 5], sizes = [16, 1], strides = [1, 1]} : vector<16x6xf32> to vector<16x1xf32>
    %41 = vector.extract_strided_slice %2 {offsets = [5, 0], sizes = [1, 128], strides = [1, 1]} : vector<128x128xbf16> to vector<1x128xbf16>
    %42 = arith.extf %41 : vector<1x128xbf16> to vector<1x128xf32>
    %43 = vector.broadcast %40 : vector<16x1xf32> to vector<16x128xf32>
    %44 = vector.broadcast %42 : vector<1x128xf32> to vector<16x128xf32>
    %45 = arith.mulf %43, %44 : vector<16x128xf32>
    %46 = arith.addf %39, %45 : vector<16x128xf32>
    %47 = math.tanh %46 : vector<16x128xf32>
    %48 = arith.truncf %47 : vector<16x128xf32> to vector<16x128xbf16>
    %c1 = arith.constant 1 : index
    %c0_6 = arith.constant 0 : index
    %c0_7 = arith.constant 0 : index
    %49 = vector.load %arg2[%c1, %c0_6, %c0_7] : memref<8x128x128xbf16, #tpu.memory_space<vmem>>, vector<1x128x128xbf16>
    %50 = vector.shape_cast %49 : vector<1x128x128xbf16> to vector<128x128xbf16>
    %cst = arith.constant dense<0.000000e+00> : vector<16x128xf32>
    %51 = tpu.matmul %48, %50, %cst {dimension_numbers = #tpu.dot_dimension_numbers<[1], [0], [0], [1], [0, 0, 1, 1], [], []>} : vector<16x128xbf16>, vector<128x128xbf16>, vector<16x128xf32> -> vector<16x128xf32>
    %c1_8 = arith.constant 1 : index
    %c0_9 = arith.constant 0 : index
    %52 = vector.load %arg3[%c1_8, %c0_9] : memref<8x128xf32, #tpu.memory_space<vmem>>, vector<1x128xf32>
    %53 = vector.broadcast %52 : vector<1x128xf32> to vector<16x128xf32>
    %54 = arith.addf %51, %53 : vector<16x128xf32>
    %55 = math.tanh %54 : vector<16x128xf32>
    %56 = arith.truncf %55 : vector<16x128xf32> to vector<16x128xbf16>
    %c2 = arith.constant 2 : index
    %c0_10 = arith.constant 0 : index
    %c0_11 = arith.constant 0 : index
    %57 = vector.load %arg2[%c2, %c0_10, %c0_11] : memref<8x128x128xbf16, #tpu.memory_space<vmem>>, vector<1x128x128xbf16>
    %58 = vector.shape_cast %57 : vector<1x128x128xbf16> to vector<128x128xbf16>
    %cst_12 = arith.constant dense<0.000000e+00> : vector<16x128xf32>
    %59 = tpu.matmul %56, %58, %cst_12 {dimension_numbers = #tpu.dot_dimension_numbers<[1], [0], [0], [1], [0, 0, 1, 1], [], []>} : vector<16x128xbf16>, vector<128x128xbf16>, vector<16x128xf32> -> vector<16x128xf32>
    %c2_13 = arith.constant 2 : index
    %c0_14 = arith.constant 0 : index
    %60 = vector.load %arg3[%c2_13, %c0_14] : memref<8x128xf32, #tpu.memory_space<vmem>>, vector<1x128xf32>
    %61 = vector.broadcast %60 : vector<1x128xf32> to vector<16x128xf32>
    %62 = arith.addf %59, %61 : vector<16x128xf32>
    %63 = math.tanh %62 : vector<16x128xf32>
    %64 = arith.truncf %63 : vector<16x128xf32> to vector<16x128xbf16>
    %c3 = arith.constant 3 : index
    %c0_15 = arith.constant 0 : index
    %c0_16 = arith.constant 0 : index
    %65 = vector.load %arg2[%c3, %c0_15, %c0_16] : memref<8x128x128xbf16, #tpu.memory_space<vmem>>, vector<1x128x128xbf16>
    %66 = vector.shape_cast %65 : vector<1x128x128xbf16> to vector<128x128xbf16>
    %cst_17 = arith.constant dense<0.000000e+00> : vector<16x128xf32>
    %67 = tpu.matmul %64, %66, %cst_17 {dimension_numbers = #tpu.dot_dimension_numbers<[1], [0], [0], [1], [0, 0, 1, 1], [], []>} : vector<16x128xbf16>, vector<128x128xbf16>, vector<16x128xf32> -> vector<16x128xf32>
    %c3_18 = arith.constant 3 : index
    %c0_19 = arith.constant 0 : index
    %68 = vector.load %arg3[%c3_18, %c0_19] : memref<8x128xf32, #tpu.memory_space<vmem>>, vector<1x128xf32>
    %69 = vector.broadcast %68 : vector<1x128xf32> to vector<16x128xf32>
    %70 = arith.addf %67, %69 : vector<16x128xf32>
    %71 = math.tanh %70 : vector<16x128xf32>
    %72 = arith.truncf %71 : vector<16x128xf32> to vector<16x128xbf16>
    %c4 = arith.constant 4 : index
    %c0_20 = arith.constant 0 : index
    %c0_21 = arith.constant 0 : index
    %73 = vector.load %arg2[%c4, %c0_20, %c0_21] : memref<8x128x128xbf16, #tpu.memory_space<vmem>>, vector<1x128x128xbf16>
    %74 = vector.shape_cast %73 : vector<1x128x128xbf16> to vector<128x128xbf16>
    %cst_22 = arith.constant dense<0.000000e+00> : vector<16x128xf32>
    %75 = tpu.matmul %72, %74, %cst_22 {dimension_numbers = #tpu.dot_dimension_numbers<[1], [0], [0], [1], [0, 0, 1, 1], [], []>} : vector<16x128xbf16>, vector<128x128xbf16>, vector<16x128xf32> -> vector<16x128xf32>
    %c4_23 = arith.constant 4 : index
    %c0_24 = arith.constant 0 : index
    %76 = vector.load %arg3[%c4_23, %c0_24] : memref<8x128xf32, #tpu.memory_space<vmem>>, vector<1x128xf32>
    %77 = vector.broadcast %76 : vector<1x128xf32> to vector<16x128xf32>
    %78 = arith.addf %75, %77 : vector<16x128xf32>
    %79 = math.tanh %78 : vector<16x128xf32>
    %80 = arith.truncf %79 : vector<16x128xf32> to vector<16x128xbf16>
    %c5 = arith.constant 5 : index
    %c0_25 = arith.constant 0 : index
    %c0_26 = arith.constant 0 : index
    %81 = vector.load %arg2[%c5, %c0_25, %c0_26] : memref<8x128x128xbf16, #tpu.memory_space<vmem>>, vector<1x128x128xbf16>
    %82 = vector.shape_cast %81 : vector<1x128x128xbf16> to vector<128x128xbf16>
    %cst_27 = arith.constant dense<0.000000e+00> : vector<16x128xf32>
    %83 = tpu.matmul %80, %82, %cst_27 {dimension_numbers = #tpu.dot_dimension_numbers<[1], [0], [0], [1], [0, 0, 1, 1], [], []>} : vector<16x128xbf16>, vector<128x128xbf16>, vector<16x128xf32> -> vector<16x128xf32>
    %c5_28 = arith.constant 5 : index
    %c0_29 = arith.constant 0 : index
    %84 = vector.load %arg3[%c5_28, %c0_29] : memref<8x128xf32, #tpu.memory_space<vmem>>, vector<1x128xf32>
    %85 = vector.broadcast %84 : vector<1x128xf32> to vector<16x128xf32>
    %86 = arith.addf %83, %85 : vector<16x128xf32>
    %87 = math.tanh %86 : vector<16x128xf32>
    %88 = arith.truncf %87 : vector<16x128xf32> to vector<16x128xbf16>
    %c6 = arith.constant 6 : index
    %c0_30 = arith.constant 0 : index
    %c0_31 = arith.constant 0 : index
    %89 = vector.load %arg2[%c6, %c0_30, %c0_31] : memref<8x128x128xbf16, #tpu.memory_space<vmem>>, vector<1x128x128xbf16>
    %90 = vector.shape_cast %89 : vector<1x128x128xbf16> to vector<128x128xbf16>
    %cst_32 = arith.constant dense<0.000000e+00> : vector<16x128xf32>
    %91 = tpu.matmul %88, %90, %cst_32 {dimension_numbers = #tpu.dot_dimension_numbers<[1], [0], [0], [1], [0, 0, 1, 1], [], []>} : vector<16x128xbf16>, vector<128x128xbf16>, vector<16x128xf32> -> vector<16x128xf32>
    %c6_33 = arith.constant 6 : index
    %c0_34 = arith.constant 0 : index
    %92 = vector.load %arg3[%c6_33, %c0_34] : memref<8x128xf32, #tpu.memory_space<vmem>>, vector<1x128xf32>
    %93 = vector.broadcast %92 : vector<1x128xf32> to vector<16x128xf32>
    %94 = arith.addf %91, %93 : vector<16x128xf32>
    %95 = math.tanh %94 : vector<16x128xf32>
    %96 = arith.truncf %95 : vector<16x128xf32> to vector<16x128xbf16>
    %c7 = arith.constant 7 : index
    %c0_35 = arith.constant 0 : index
    %c0_36 = arith.constant 0 : index
    %97 = vector.load %arg2[%c7, %c0_35, %c0_36] : memref<8x128x128xbf16, #tpu.memory_space<vmem>>, vector<1x128x128xbf16>
    %98 = vector.shape_cast %97 : vector<1x128x128xbf16> to vector<128x128xbf16>
    %cst_37 = arith.constant dense<0.000000e+00> : vector<16x128xf32>
    %99 = tpu.matmul %96, %98, %cst_37 {dimension_numbers = #tpu.dot_dimension_numbers<[1], [0], [0], [1], [0, 0, 1, 1], [], []>} : vector<16x128xbf16>, vector<128x128xbf16>, vector<16x128xf32> -> vector<16x128xf32>
    %c7_38 = arith.constant 7 : index
    %c0_39 = arith.constant 0 : index
    %100 = vector.load %arg3[%c7_38, %c0_39] : memref<8x128xf32, #tpu.memory_space<vmem>>, vector<1x128xf32>
    %101 = vector.broadcast %100 : vector<1x128xf32> to vector<16x128xf32>
    %102 = arith.addf %99, %101 : vector<16x128xf32>
    %103 = vector.extract_strided_slice %102 {offsets = [0, 0], sizes = [16, 16], strides = [1, 1]} : vector<16x128xf32> to vector<16x16xf32>
    %c0_40 = arith.constant 0 : index
    %c0_41 = arith.constant 0 : index
    %104 = vector.load %arg4[%c0_40, %c0_41] : memref<16x16xf32, #tpu.memory_space<vmem>>, vector<16x16xf32>
    tpu.vector_store %arg4[%c0_40, %c0_41], %103 {strides = array<i32>} : memref<16x16xf32, #tpu.memory_space<vmem>>, vector<16x16xf32>,
    return
  }
  func.func @transform_0(%arg0: i32) -> (i32, i32) {
    %c0_i32 = arith.constant 0 : i32
    %c0_i32_0 = arith.constant 0 : i32
    return %arg0, %c0_i32 : i32, i32
  }
  func.func @transform_1(%arg0: i32) -> (i32, i32, i32) {
    %c0_i32 = arith.constant 0 : i32
    %c0_i32_0 = arith.constant 0 : i32
    %c0_i32_1 = arith.constant 0 : i32
    %c0_i32_2 = arith.constant 0 : i32
    return %c0_i32, %c0_i32_0, %c0_i32_1 : i32, i32, i32
  }
  func.func @transform_2(%arg0: i32) -> (i32, i32) {
    %c0_i32 = arith.constant 0 : i32
    %c0_i32_0 = arith.constant 0 : i32
    %c0_i32_1 = arith.constant 0 : i32
    return %c0_i32, %c0_i32_0 : i32, i32
  }
  func.func @transform_3(%arg0: i32) -> (i32, i32) {
    %c0_i32 = arith.constant 0 : i32
    %c0_i32_0 = arith.constant 0 : i32
    return %arg0, %c0_i32 : i32, i32
  }
}

</mosaic_0001>

<llo_original>
// kernel: pinn_forward.1
$region0: #{pinn_forward.1}
  #allocation0 [shape = 'u32[]', space=smem, size = 0x4, offset = 0x4, fixed_abs, tag = 'smem constant byte address 0x4 - core index']
  #allocation1 [shape = 'u32[144,128]{1,0:T(1,128)}', space=vmem, size = 0x12000, scoped, tag = 'internal scratch']
  %s0 = inlined_call_operand.vmem [shape: f32[32,6], index: 0, kind: input, shape index: {}]
  %s1 = inlined_call_operand.hbm [shape: bf16[8,128,128], index: 1, kind: input, shape index: {}]
  %s2 = inlined_call_operand.vmem [shape: f32[8,128], index: 2, kind: input, shape index: {}]
  %s3 = inlined_call_operand.vmem [shape: f32[32,16], index: 3, kind: output, shape index: {}]
  %s4 = sld [smem:[#allocation0]]
  $region49: #{pinn_forward.1} parent=0
    _
  %s6 = ssub.s32 1, %s4
  %s7 = scalar_select 0, %s6, %s4
  $region1: #{pinn_forward.1} parent=0
    #allocation2 [shape = 'u8[262144]{0}', space=vmem, size = 0x40000, scoped, tag = 'input window, operand 1, single buffered']
    #allocation3 [shape = 's32[2]{0}', space=sflag, size = 0x8, scoped, tag = 'scoped memory for pinn_forward.1']
    %8 = vsyncpa [#allocation3], 0
    loop: start=0, step=1, limit=4
    $region2: #{pinn_forward.1} parent=1 // loop_pre_header
      _
    $region3: #{pinn_forward.1} parent=1 // loop_header
      %s10 = sphi 0, %s14
      %p11 = scmp.ge.s32.totalorder %s10, 4
      %s20 = sphi 0, %s22
      %s23 = sphi 0, %s20
      %s24 = sphi 0, %s23
      %s40 = sphi 0, %s24
      %s44 = sphi 0, %s44
      %s46 = sphi 0, %s44
      %s47 = sphi 0, %s46
      %s61 = sphi 0, %s47
      %s65 = sphi 0, %s65
      %s67 = sphi 0, %s65
      %s68 = sphi 0, %s67
      %s82 = sphi 0, %s68
      %s88 = sphi 0, %s90
      %s91 = sphi 0, %s88
      %s92 = sphi 0, %s91
      %s108 = sphi 0, %s92
    $region4: #{pinn_forward.1} parent=1 // loop_header_branch
      %13 = sbr.rel (%p11) target = $region8
    $region5: #{pinn_forward.1} parent=1 // loop_body
      %s15 = ssub.s32 %s10, 1
      %s16 = ssub.s32 %s10, 2
      %s17 = sadd.s32 %s10, 1
      %s18 = ssub.s32 %s10, %s17
      %p19 = scmp.eq.s32.totalorder %s18, 0
      %s21 = sadd.s32 %s20, 1
      %s22 = scalar_select %p19, %s20, %s21
      %p25 = pneg %p19
      %p26 = scmp.eq.s32.totalorder %s10, 1
      %p27 = por %p25, %p26
      %p28 = scmp.ne.s32.totalorder %s20, %s23
      %p29 = scmp.eq.s32.totalorder %s10, 0
      %p30 = por %p28, %p29
      %p31 = scmp.ne.s32.totalorder %s20, %s23
      %p32 = scmp.eq.s32.totalorder %s15, 1
      %p33 = por %p31, %p32
      %p34 = scmp.ne.s32.totalorder %s23, %s24
      %p35 = scmp.eq.s32.totalorder %s15, 0
      %p36 = por %p34, %p35
      %p37 = scmp.ne.s32.totalorder %s23, %s24
      %p38 = scmp.eq.s32.totalorder %s16, 1
      %p39 = por %p37, %p38
      %p41 = scmp.ne.s32.totalorder %s24, %s40
      %p42 = scmp.eq.s32.totalorder %s16, 0
      %p43 = por %p41, %p42
      %s45 = sadd.s32 %s44, 1
      %p48 = scmp.eq.s32.totalorder %s10, 1
      %p49 = scmp.ne.s32.totalorder %s44, %s46
      %p50 = scmp.eq.s32.totalorder %s10, 0
      %p51 = por %p49, %p50
      %p52 = scmp.ne.s32.totalorder %s44, %s46
      %p53 = scmp.eq.s32.totalorder %s15, 1
      %p54 = por %p52, %p53
      %p55 = scmp.ne.s32.totalorder %s46, %s47
      %p56 = scmp.eq.s32.totalorder %s15, 0
      %p57 = por %p55, %p56
      %p58 = scmp.ne.s32.totalorder %s46, %s47
      %p59 = scmp.eq.s32.totalorder %s16, 1
      %p60 = por %p58, %p59
      %p62 = scmp.ne.s32.totalorder %s47, %s61
      %p63 = scmp.eq.s32.totalorder %s16, 0
      %p64 = por %p62, %p63
      %s66 = sadd.s32 %s65, 1
      %p69 = scmp.eq.s32.totalorder %s10, 1
      %p70 = scmp.ne.s32.totalorder %s65, %s67
      %p71 = scmp.eq.s32.totalorder %s10, 0
      %p72 = por %p70, %p71
      %p73 = scmp.ne.s32.totalorder %s65, %s67
      %p74 = scmp.eq.s32.totalorder %s15, 1
      %p75 = por %p73, %p74
      %p76 = scmp.ne.s32.totalorder %s67, %s68
      %p77 = scmp.eq.s32.totalorder %s15, 0
      %p78 = por %p76, %p77
      %p79 = scmp.ne.s32.totalorder %s67, %s68
      %p80 = scmp.eq.s32.totalorder %s16, 1
      %p81 = por %p79, %p80
      %p83 = scmp.ne.s32.totalorder %s68, %s82
      %p84 = scmp.eq.s32.totalorder %s16, 0
      %p85 = por %p83, %p84
      %s86 = ssub.s32 %s10, %s17
      %p87 = scmp.eq.s32.totalorder %s86, 0
      %s89 = sadd.s32 %s88, 1
      %s90 = scalar_select %p87, %s88, %s89
      %p93 = pneg %p87
      %p94 = scmp.eq.s32.totalorder %s10, 1
      %p95 = por %p93, %p94
      %p96 = scmp.ne.s32.totalorder %s88, %s91
      %p97 = scmp.eq.s32.totalorder %s10, 0
      %p98 = por %p96, %p97
      %p99 = scmp.ne.s32.totalorder %s88, %s91
      %p100 = scmp.eq.s32.totalorder %s15, 1
      %p101 = por %p99, %p100
      %p102 = scmp.ne.s32.totalorder %s91, %s92
      %p103 = scmp.eq.s32.totalorder %s15, 0
      %p104 = por %p102, %p103
      %p105 = scmp.ne.s32.totalorder %s91, %s92
      %p106 = scmp.eq.s32.totalorder %s16, 1
      %p107 = por %p105, %p106
      %p109 = scmp.ne.s32.totalorder %s92, %s108
      %p110 = scmp.eq.s32.totalorder %s16, 0
      %p111 = por %p109, %p110
      %p112 = scmp.le.s32.totalorder 1, %s10
      %p113 = scmp.lt.s32.totalorder %s10, 3
      %p114 = pnand %p112, %p113
      %p115 = pneg %p114
      // Predicated region
      $region9: #{pinn_forward.1} parent=5 // pred_check
        _
      $region10: #{pinn_forward.1} parent=5 // pred_check_branch
        %117 = sbr.rel (%p114) target = $region12
      $region11: #{pinn_forward.1} parent=5 // pred_region
        %s118 = ssub.s32 %s10, 1
        // Predicated region
        $region13: #{pinn_forward.1} parent=11 // pred_check
          %p119 = pneg %p57
        $region14: #{pinn_forward.1} parent=11 // pred_check_branch
          %121 = sbr.rel (%p119) target = $region16
        $region15: #{pinn_forward.1} parent=11 // pred_region
          %s123 = ssub.s32 8192, 8192
          %124 = vsyncadd [#allocation3], %s123
          %s125 = sshll.u32 [#allocation2], 4
          %s126 = int_to_ptr.vmem [resolvable:$true] %s125
          %131 = dma.hbm_to_vmem [thread:$0]  %s1, 8192, %s126, [#allocation3], 64, 64, 4
        $region16: #{pinn_forward.1} parent=11 // pred_fallthru
          _
        // Predicated region
        $region17: #{pinn_forward.1} parent=11 // pred_check
          %p132 = pneg %p78
        $region18: #{pinn_forward.1} parent=11 // pred_check_branch
          %134 = sbr.rel (%p132) target = $region20
        $region19: #{pinn_forward.1} parent=11 // pred_region
          _
        $region20: #{pinn_forward.1} parent=11 // pred_fallthru
          _
      $region12: #{pinn_forward.1} parent=5 // pred_fallthru
        _
      %p135 = scmp.lt.s32.totalorder %s10, 2
      // Predicated region
      $region21: #{pinn_forward.1} parent=5 // pred_check
        %p136 = pneg %p135
      $region22: #{pinn_forward.1} parent=5 // pred_check_branch
        %138 = sbr.rel (%p136) target = $region24
      $region23: #{pinn_forward.1} parent=5 // pred_region
        // Predicated region
        $region25: #{pinn_forward.1} parent=23 // pred_check
          %p139 = pneg %p30
        $region26: #{pinn_forward.1} parent=23 // pred_check_branch
          %141 = sbr.rel (%p139) target = $region28
        $region27: #{pinn_forward.1} parent=23 // pred_region
          %s142 = smul.u32 2, %s10
          %p143 = scmp.lt.s32.totalorder %s142, 3
          %s144 = scalar_select %p143, %s142, 3
          %s145 = smul.addr %s144, 8
          %s146 = scalar_lea.vmem %s0, %s145
          %s147 = smul.u32 2, %s10
        $region28: #{pinn_forward.1} parent=23 // pred_fallthru
          _
      $region24: #{pinn_forward.1} parent=5 // pred_fallthru
        _
      %p148 = scmp.le.s32.totalorder 1, %s10
      %p149 = scmp.lt.s32.totalorder %s10, 3
      %p150 = pnand %p148, %p149
      %p151 = pneg %p150
      // Predicated region
      $region29: #{pinn_forward.1} parent=5 // pred_check
        _
      $region30: #{pinn_forward.1} parent=5 // pred_check_branch
        %153 = sbr.rel (%p150) target = $region32
      $region31: #{pinn_forward.1} parent=5 // pred_region
        %s154 = ssub.s32 %s10, 1
        // Predicated region
        $region33: #{pinn_forward.1} parent=31 // pred_check
          %p155 = pneg %p57
        $region34: #{pinn_forward.1} parent=31 // pred_check_branch
          %157 = sbr.rel (%p155) target = $region36
        $region35: #{pinn_forward.1} parent=31 // pred_region
          %158 = dma.done [#allocation3], 8192
        $region36: #{pinn_forward.1} parent=31 // pred_fallthru
          _
        %s159 = smul.u32 2, %s15
        %p160 = scmp.lt.s32.totalorder %s159, 3
        %s161 = scalar_select %p160, %s159, 3
        %s162 = smul.addr %s161, 8
        %s163 = scalar_lea.vmem %s0, %s162
        %p164 = pneg %p36
        %p165 = pneg %p33
        %p166 = pneg %p57
        %p167 = pneg %p54
        %p168 = pneg %p78
        %p169 = pneg %p75
        %p170 = pneg %p104
        %p171 = pneg %p101
        %s172 = smul.u32 2, %s15
        %p173 = scmp.lt.s32.totalorder %s172, 3
        %s174 = scalar_select %p173, %s172, 3
        %s175 = smul.addr %s174, 8
        %s176 = scalar_lea.vmem %s3, %s175
        %s177 = smul.u32 2, %s15
        %p178 = scmp.lt.s32.totalorder %s177, 3
        %s179 = scalar_select %p178, %s177, 3
        %s180 = smul.addr %s179, 8
        %s181 = scalar_lea.vmem %s0, %s180
        %s182 = smul.u32 2, %s15
        %s183 = smul.u32 2, %s15
        %p184 = scmp.lt.s32.totalorder %s183, 3
        %s185 = scalar_select %p184, %s183, 3
        %s186 = smul.addr %s185, 8
        %s187 = scalar_lea.vmem %s3, %s186
        %s188 = smul.u32 2, %s15
        %v190 = vld [vmem:[%s181] sm:$0xff]
        %v191 = vld [vmem:[%s181 + $0x8] sm:$0xff]
        %v192 = vld [vmem:[#allocation2] sm:$0xf]
        %v193 = vld [vmem:[%s2] sm:$0x1]
        %v194 = vunpack.c.l.bf16 %v192
        %196 = vset.pattern.permute.xlu0 0
        %197 = vperm.xlu0 %196, %v190
        %v198 = vpop.permute.xlu0 %197
        %201 = vset.pattern.permute.xlu0 0
        %202 = vperm.xlu0 %201, %v191
        %v203 = vpop.permute.xlu0 %202
        %v205 = vlaneseq
        %v206 = vshrl.u32 %v205, 7
        %v207 = vsub.s32 0, %v206
        %v208 = vrot.slane %v194, %v207
        %v209 = vmul.f32 %v198, %v208
        %v210 = vmul.f32 %v203, %v208
        %v211 = vlaneseq
        %v212 = vshrl.u32 %v211, 7
        %v213 = vsub.s32 0, %v212
        %v214 = vrot.slane %v193, %v213
        %v215 = vadd.f32 %v214, %v209
        %v216 = vadd.f32 %v214, %v210
        %217 = vset.pattern.permute.xlu0 1
        %218 = vperm.xlu0 %217, %v190
        %v219 = vpop.permute.xlu0 %218
        %221 = vset.pattern.permute.xlu0 1
        %222 = vperm.xlu0 %221, %v191
        %v223 = vpop.permute.xlu0 %222
        %v225 = vlaneseq
        %v226 = vshrl.u32 %v225, 7
        %v227 = vsub.s32 1, %v226
        %v228 = vrot.slane %v194, %v227
        %v229 = vmul.f32 %v219, %v228
        %v230 = vmul.f32 %v223, %v228
        %v231 = vadd.f32 %v215, %v229
        %v232 = vadd.f32 %v216, %v230
        %233 = vset.pattern.permute.xlu0 2
        %234 = vperm.xlu0 %233, %v190
        %v235 = vpop.permute.xlu0 %234
        %237 = vset.pattern.permute.xlu0 2
        %238 = vperm.xlu0 %237, %v191
        %v239 = vpop.permute.xlu0 %238
        %v241 = vlaneseq
        %v242 = vshrl.u32 %v241, 7
        %v243 = vsub.s32 2, %v242
        %v244 = vrot.slane %v194, %v243
        %v245 = vmul.f32 %v235, %v244
        %v246 = vmul.f32 %v239, %v244
        %v247 = vadd.f32 %v231, %v245
        %v248 = vadd.f32 %v232, %v246
        %249 = vset.pattern.permute.xlu0 3
        %250 = vperm.xlu0 %249, %v190
        %v251 = vpop.permute.xlu0 %250
        %253 = vset.pattern.permute.xlu0 3
        %254 = vperm.xlu0 %253, %v191
        %v255 = vpop.permute.xlu0 %254
        %v257 = vlaneseq
        %v258 = vshrl.u32 %v257, 7
        %v259 = vsub.s32 3, %v258
        %v260 = vrot.slane %v194, %v259
        %v261 = vmul.f32 %v251, %v260
        %v262 = vmul.f32 %v255, %v260
        %v263 = vadd.f32 %v247, %v261
        %v264 = vadd.f32 %v248, %v262
        %265 = vset.pattern.permute.xlu0 4
        %266 = vperm.xlu0 %265, %v190
        %v267 = vpop.permute.xlu0 %266
        %269 = vset.pattern.permute.xlu0 4
        %270 = vperm.xlu0 %269, %v191
        %v271 = vpop.permute.xlu0 %270
        %v273 = vlaneseq
        %v274 = vshrl.u32 %v273, 7
        %v275 = vsub.s32 4, %v274
        %v276 = vrot.slane %v194, %v275
        %v277 = vmul.f32 %v267, %v276
        %v278 = vmul.f32 %v271, %v276
        %v279 = vadd.f32 %v263, %v277
        %v280 = vadd.f32 %v264, %v278
        %281 = vset.pattern.permute.xlu0 5
        %282 = vperm.xlu0 %281, %v190
        %v283 = vpop.permute.xlu0 %282
        %285 = vset.pattern.permute.xlu0 5
        %286 = vperm.xlu0 %285, %v191
        %v287 = vpop.permute.xlu0 %286
        %v289 = vlaneseq
        %v290 = vshrl.u32 %v289, 7
        %v291 = vsub.s32 5, %v290
        %v292 = vrot.slane %v194, %v291
        %v293 = vmul.f32 %v283, %v292
        %v294 = vmul.f32 %v287, %v292
        %v295 = vadd.f32 %v279, %v293
        %v296 = vadd.f32 %v280, %v294
        %v297 = vtanh.pop %v295
        %v298 = vtanh.pop %v296
        %v299 = vpack.c.bf16 %v298, %v297
        %s300 = scalar_lea.vmem [#allocation2], 64
        %v301 = vld [vmem:[%s300] sm:$0xf]
        %v302 = vld [vmem:[%s300 + $0x4] sm:$0xf]
        %v303 = vld [vmem:[%s300 + $0x8] sm:$0xf]
        %v304 = vld [vmem:[%s300 + $0xc] sm:$0xf]
        %v305 = vld [vmem:[%s300 + $0x10] sm:$0xf]
        %v306 = vld [vmem:[%s300 + $0x14] sm:$0xf]
        %v307 = vld [vmem:[%s300 + $0x18] sm:$0xf]
        %v308 = vld [vmem:[%s300 + $0x1c] sm:$0xf]
        %v309 = vld [vmem:[%s300 + $0x20] sm:$0xf]
        %v310 = vld [vmem:[%s300 + $0x24] sm:$0xf]
        %v311 = vld [vmem:[%s300 + $0x28] sm:$0xf]
        %v312 = vld [vmem:[%s300 + $0x2c] sm:$0xf]
        %v313 = vld [vmem:[%s300 + $0x30] sm:$0xf]
        %v314 = vld [vmem:[%s300 + $0x34] sm:$0xf]
        %v315 = vld [vmem:[%s300 + $0x38] sm:$0xf]
        %v316 = vld [vmem:[%s300 + $0x3c] sm:$0xf]
        %v317 = vld [vmem:[%s2 + $0x1] sm:$0x1]
        %v318 = vlaneseq
        %v319 = vshrl.u32 %v318, 7
        %v320 = vsub.s32 0, %v319
        %v321 = vrot.slane %v317, %v320
        %v338 = vunpack.c.l.b16 %v301
        %v339 = vunpack.c.l.b16 %v302
        %v340 = vunpack.c.l.b16 %v303
        %v341 = vunpack.c.l.b16 %v304
        %v342 = vunpack.c.l.b16 %v305
        %v343 = vunpack.c.l.b16 %v306
        %v344 = vunpack.c.l.b16 %v307
        %v345 = vunpack.c.l.b16 %v308
        %v346 = vunpack.c.l.b16 %v309
        %v347 = vunpack.c.l.b16 %v310
        %v348 = vunpack.c.l.b16 %v311
        %v349 = vunpack.c.l.b16 %v312
        %v350 = vunpack.c.l.b16 %v313
        %v351 = vunpack.c.l.b16 %v314
        %v352 = vunpack.c.l.b16 %v315
        %v353 = vunpack.c.l.b16 %v316
        %v354 = vpack.c.b16 %v339, %v338
        %v355 = vpack.c.b16 %v341, %v340
        %v356 = vpack.c.b16 %v343, %v342
        %v357 = vpack.c.b16 %v345, %v344
        %v358 = vpack.c.b16 %v347, %v346
        %v359 = vpack.c.b16 %v349, %v348
        %v360 = vpack.c.b16 %v351, %v350
        %v361 = vpack.c.b16 %v353, %v352
        %370 = vmatprep.subr.bf16.mxu0 0
        %371 = vmatpush1.bf16.msra.mxu0 %v361
        %372 = vmatprep.subr.bf16.mxu0 0
        %373 = vmatpush1.bf16.msra.mxu0 %v360
        %374 = vmatprep.subr.bf16.mxu0 0
        %375 = vmatpush1.bf16.msra.mxu0 %v359
        %376 = vmatprep.subr.bf16.mxu0 0
        %377 = vmatpush1.bf16.msra.mxu0 %v358
        %378 = vmatprep.subr.bf16.mxu0 0
        %379 = vmatpush1.bf16.msra.mxu0 %v357
        %380 = vmatprep.subr.bf16.mxu0 0
        %381 = vmatpush1.bf16.msra.mxu0 %v356
        %382 = vmatprep.subr.bf16.mxu0 0
        %383 = vmatpush1.bf16.msra.mxu0 %v355
        %384 = vmatprep.subr.bf16.mxu0 0
        %385 = vmatpush1.bf16.msra.mxu0 %v354
        %386 = vmatprep.subr.bf16.mxu0 0
        %387 = vmatpush2.bf16.msra.mxu0 0
        %388 = vmatprep.subr.bf16.mxu0 0
        %389 = vmatpush2.bf16.msra.mxu0 0
        %390 = vmatprep.subr.bf16.mxu0 0
        %391 = vmatpush2.bf16.msra.mxu0 0
        %392 = vmatprep.subr.bf16.mxu0 0
        %393 = vmatpush2.bf16.msra.mxu0 0
        %394 = vmatprep.subr.bf16.mxu0 0
        %395 = vmatpush2.bf16.msra.mxu0 0
        %396 = vmatprep.subr.bf16.mxu0 0
        %397 = vmatpush2.bf16.msra.mxu0 0
        %398 = vmatprep.subr.bf16.mxu0 0
        %399 = vmatpush2.bf16.msra.mxu0 0
        %400 = vmatprep.subr.bf16.mxu0 0
        %401 = vmatpush2.bf16.msra.mxu0 0
        %402 = vmatprep.mubr.bf16.mxu0 0
        %403 = vmatmul.mubr.bf16.gmra.mxu0 %v299
        %v404 = vpop.f32.mrf.mxu0
        %v405 = vadd.f32 %v321, %v404
        %v406 = vpop.f32.mrf.mxu0
        %v407 = vpop.f32.mrf.mxu0
        %v408 = vadd.f32 %v321, %v407
        %v409 = vpop.f32.mrf.mxu0
        %410 = vdwg.mxu0
        %v411 = vtanh.pop %v405
        %v412 = vtanh.pop %v408
        %v413 = vpack.c.bf16 %v412, %v411
        %s414 = scalar_lea.vmem [#allocation2], 128
        %v415 = vld [vmem:[%s414] sm:$0xf]
        %v416 = vld [vmem:[%s414 + $0x4] sm:$0xf]
        %v417 = vld [vmem:[%s414 + $0x8] sm:$0xf]
        %v418 = vld [vmem:[%s414 + $0xc] sm:$0xf]
        %v419 = vld [vmem:[%s414 + $0x10] sm:$0xf]
        %v420 = vld [vmem:[%s414 + $0x14] sm:$0xf]
        %v421 = vld [vmem:[%s414 + $0x18] sm:$0xf]
        %v422 = vld [vmem:[%s414 + $0x1c] sm:$0xf]
        %v423 = vld [vmem:[%s414 + $0x20] sm:$0xf]
        %v424 = vld [vmem:[%s414 + $0x24] sm:$0xf]
        %v425 = vld [vmem:[%s414 + $0x28] sm:$0xf]
        %v426 = vld [vmem:[%s414 + $0x2c] sm:$0xf]
        %v427 = vld [vmem:[%s414 + $0x30] sm:$0xf]
        %v428 = vld [vmem:[%s414 + $0x34] sm:$0xf]
        %v429 = vld [vmem:[%s414 + $0x38] sm:$0xf]
        %v430 = vld [vmem:[%s414 + $0x3c] sm:$0xf]
        %v431 = vld [vmem:[%s2 + $0x2] sm:$0x1]
        %v432 = vlaneseq
        %v433 = vshrl.u32 %v432, 7
        %v434 = vsub.s32 0, %v433
        %v435 = vrot.slane %v431, %v434
        %v452 = vunpack.c.l.b16 %v415
        %v453 = vunpack.c.l.b16 %v416
        %v454 = vunpack.c.l.b16 %v417
        %v455 = vunpack.c.l.b16 %v418
        %v456 = vunpack.c.l.b16 %v419
        %v457 = vunpack.c.l.b16 %v420
        %v458 = vunpack.c.l.b16 %v421
        %v459 = vunpack.c.l.b16 %v422
        %v460 = vunpack.c.l.b16 %v423
        %v461 = vunpack.c.l.b16 %v424
        %v462 = vunpack.c.l.b16 %v425
        %v463 = vunpack.c.l.b16 %v426
        %v464 = vunpack.c.l.b16 %v427
        %v465 = vunpack.c.l.b16 %v428
        %v466 = vunpack.c.l.b16 %v429
        %v467 = vunpack.c.l.b16 %v430
        %v468 = vpack.c.b16 %v453, %v452
        %v469 = vpack.c.b16 %v455, %v454
        %v470 = vpack.c.b16 %v457, %v456
        %v471 = vpack.c.b16 %v459, %v458
        %v472 = vpack.c.b16 %v461, %v460
        %v473 = vpack.c.b16 %v463, %v462
        %v474 = vpack.c.b16 %v465, %v464
        %v475 = vpack.c.b16 %v467, %v466
        %484 = vmatprep.subr.bf16.mxu0 0
        %485 = vmatpush1.bf16.msra.mxu0 %v475
        %486 = vmatprep.subr.bf16.mxu0 0
        %487 = vmatpush1.bf16.msra.mxu0 %v474
        %488 = vmatprep.subr.bf16.mxu0 0
        %489 = vmatpush1.bf16.msra.mxu0 %v473
        %490 = vmatprep.subr.bf16.mxu0 0
        %491 = vmatpush1.bf16.msra.mxu0 %v472
        %492 = vmatprep.subr.bf16.mxu0 0
        %493 = vmatpush1.bf16.msra.mxu0 %v471
        %494 = vmatprep.subr.bf16.mxu0 0
        %495 = vmatpush1.bf16.msra.mxu0 %v470
        %496 = vmatprep.subr.bf16.mxu0 0
        %497 = vmatpush1.bf16.msra.mxu0 %v469
        %498 = vmatprep.subr.bf16.mxu0 0
        %499 = vmatpush1.bf16.msra.mxu0 %v468
        %500 = vmatprep.subr.bf16.mxu0 0
        %501 = vmatpush2.bf16.msra.mxu0 0
        %502 = vmatprep.subr.bf16.mxu0 0
        %503 = vmatpush2.bf16.msra.mxu0 0
        %504 = vmatprep.subr.bf16.mxu0 0
        %505 = vmatpush2.bf16.msra.mxu0 0
        %506 = vmatprep.subr.bf16.mxu0 0
        %507 = vmatpush2.bf16.msra.mxu0 0
        %508 = vmatprep.subr.bf16.mxu0 0
        %509 = vmatpush2.bf16.msra.mxu0 0
        %510 = vmatprep.subr.bf16.mxu0 0
        %511 = vmatpush2.bf16.msra.mxu0 0
        %512 = vmatprep.subr.bf16.mxu0 0
        %513 = vmatpush2.bf16.msra.mxu0 0
        %514 = vmatprep.subr.bf16.mxu0 0
        %515 = vmatpush2.bf16.msra.mxu0 0
        %516 = vmatprep.mubr.bf16.mxu0 0
        %517 = vmatmul.mubr.bf16.gmra.mxu0 %v413
        %v518 = vpop.f32.mrf.mxu0
        %v519 = vadd.f32 %v435, %v518
        %v520 = vpop.f32.mrf.mxu0
        %v521 = vpop.f32.mrf.mxu0
        %v522 = vadd.f32 %v435, %v521
        %v523 = vpop.f32.mrf.mxu0
        %524 = vdwg.mxu0
        %v525 = vtanh.pop %v519
        %v526 = vtanh.pop %v522
        %v527 = vpack.c.bf16 %v526, %v525
        %s528 = scalar_lea.vmem [#allocation2], 192
        %v529 = vld [vmem:[%s528] sm:$0xf]
        %v530 = vld [vmem:[%s528 + $0x4] sm:$0xf]
        %v531 = vld [vmem:[%s528 + $0x8] sm:$0xf]
        %v532 = vld [vmem:[%s528 + $0xc] sm:$0xf]
        %v533 = vld [vmem:[%s528 + $0x10] sm:$0xf]
        %v534 = vld [vmem:[%s528 + $0x14] sm:$0xf]
        %v535 = vld [vmem:[%s528 + $0x18] sm:$0xf]
        %v536 = vld [vmem:[%s528 + $0x1c] sm:$0xf]
        %v537 = vld [vmem:[%s528 + $0x20] sm:$0xf]
        %v538 = vld [vmem:[%s528 + $0x24] sm:$0xf]
        %v539 = vld [vmem:[%s528 + $0x28] sm:$0xf]
        %v540 = vld [vmem:[%s528 + $0x2c] sm:$0xf]
        %v541 = vld [vmem:[%s528 + $0x30] sm:$0xf]
        %v542 = vld [vmem:[%s528 + $0x34] sm:$0xf]
        %v543 = vld [vmem:[%s528 + $0x38] sm:$0xf]
        %v544 = vld [vmem:[%s528 + $0x3c] sm:$0xf]
        %v545 = vld [vmem:[%s2 + $0x3] sm:$0x1]
        %v546 = vlaneseq
        %v547 = vshrl.u32 %v546, 7
        %v548 = vsub.s32 0, %v547
        %v549 = vrot.slane %v545, %v548
        %v566 = vunpack.c.l.b16 %v529
        %v567 = vunpack.c.l.b16 %v530
        %v568 = vunpack.c.l.b16 %v531
        %v569 = vunpack.c.l.b16 %v532
        %v570 = vunpack.c.l.b16 %v533
        %v571 = vunpack.c.l.b16 %v534
        %v572 = vunpack.c.l.b16 %v535
        %v573 = vunpack.c.l.b16 %v536
        %v574 = vunpack.c.l.b16 %v537
        %v575 = vunpack.c.l.b16 %v538
        %v576 = vunpack.c.l.b16 %v539
        %v577 = vunpack.c.l.b16 %v540
        %v578 = vunpack.c.l.b16 %v541
        %v579 = vunpack.c.l.b16 %v542
        %v580 = vunpack.c.l.b16 %v543
        %v581 = vunpack.c.l.b16 %v544
        %v582 = vpack.c.b16 %v567, %v566
        %v583 = vpack.c.b16 %v569, %v568
        %v584 = vpack.c.b16 %v571, %v570
        %v585 = vpack.c.b16 %v573, %v572
        %v586 = vpack.c.b16 %v575, %v574
        %v587 = vpack.c.b16 %v577, %v576
        %v588 = vpack.c.b16 %v579, %v578
        %v589 = vpack.c.b16 %v581, %v580
        %598 = vmatprep.subr.bf16.mxu0 0
        %599 = vmatpush1.bf16.msra.mxu0 %v589
        %600 = vmatprep.subr.bf16.mxu0 0
        %601 = vmatpush1.bf16.msra.mxu0 %v588
        %602 = vmatprep.subr.bf16.mxu0 0
        %603 = vmatpush1.bf16.msra.mxu0 %v587
        %604 = vmatprep.subr.bf16.mxu0 0
        %605 = vmatpush1.bf16.msra.mxu0 %v586
        %606 = vmatprep.subr.bf16.mxu0 0
        %607 = vmatpush1.bf16.msra.mxu0 %v585
        %608 = vmatprep.subr.bf16.mxu0 0
        %609 = vmatpush1.bf16.msra.mxu0 %v584
        %610 = vmatprep.subr.bf16.mxu0 0
        %611 = vmatpush1.bf16.msra.mxu0 %v583
        %612 = vmatprep.subr.bf16.mxu0 0
        %613 = vmatpush1.bf16.msra.mxu0 %v582
        %614 = vmatprep.subr.bf16.mxu0 0
        %615 = vmatpush2.bf16.msra.mxu0 0
        %616 = vmatprep.subr.bf16.mxu0 0
        %617 = vmatpush2.bf16.msra.mxu0 0
        %618 = vmatprep.subr.bf16.mxu0 0
        %619 = vmatpush2.bf16.msra.mxu0 0
        %620 = vmatprep.subr.bf16.mxu0 0
        %621 = vmatpush2.bf16.msra.mxu0 0
        %622 = vmatprep.subr.bf16.mxu0 0
        %623 = vmatpush2.bf16.msra.mxu0 0
        %624 = vmatprep.subr.bf16.mxu0 0
        %625 = vmatpush2.bf16.msra.mxu0 0
        %626 = vmatprep.subr.bf16.mxu0 0
        %627 = vmatpush2.bf16.msra.mxu0 0
        %628 = vmatprep.subr.bf16.mxu0 0
        %629 = vmatpush2.bf16.msra.mxu0 0
        %630 = vmatprep.mubr.bf16.mxu0 0
        %631 = vmatmul.mubr.bf16.gmra.mxu0 %v527
        %v632 = vpop.f32.mrf.mxu0
        %v633 = vadd.f32 %v549, %v632
        %v634 = vpop.f32.mrf.mxu0
        %v635 = vpop.f32.mrf.mxu0
        %v636 = vadd.f32 %v549, %v635
        %v637 = vpop.f32.mrf.mxu0
        %638 = vdwg.mxu0
        %v639 = vtanh.pop %v633
        %v640 = vtanh.pop %v636
        %v641 = vpack.c.bf16 %v640, %v639
        %s642 = scalar_lea.vmem [#allocation2], 256
        %v643 = vld [vmem:[%s642] sm:$0xf]
        %v644 = vld [vmem:[%s642 + $0x4] sm:$0xf]
        %v645 = vld [vmem:[%s642 + $0x8] sm:$0xf]
        %v646 = vld [vmem:[%s642 + $0xc] sm:$0xf]
        %v647 = vld [vmem:[%s642 + $0x10] sm:$0xf]
        %v648 = vld [vmem:[%s642 + $0x14] sm:$0xf]
        %v649 = vld [vmem:[%s642 + $0x18] sm:$0xf]
        %v650 = vld [vmem:[%s642 + $0x1c] sm:$0xf]
        %v651 = vld [vmem:[%s642 + $0x20] sm:$0xf]
        %v652 = vld [vmem:[%s642 + $0x24] sm:$0xf]
        %v653 = vld [vmem:[%s642 + $0x28] sm:$0xf]
        %v654 = vld [vmem:[%s642 + $0x2c] sm:$0xf]
        %v655 = vld [vmem:[%s642 + $0x30] sm:$0xf]
        %v656 = vld [vmem:[%s642 + $0x34] sm:$0xf]
        %v657 = vld [vmem:[%s642 + $0x38] sm:$0xf]
        %v658 = vld [vmem:[%s642 + $0x3c] sm:$0xf]
        %v659 = vld [vmem:[%s2 + $0x4] sm:$0x1]
        %v660 = vlaneseq
        %v661 = vshrl.u32 %v660, 7
        %v662 = vsub.s32 0, %v661
        %v663 = vrot.slane %v659, %v662
        %v680 = vunpack.c.l.b16 %v643
        %v681 = vunpack.c.l.b16 %v644
        %v682 = vunpack.c.l.b16 %v645
        %v683 = vunpack.c.l.b16 %v646
        %v684 = vunpack.c.l.b16 %v647
        %v685 = vunpack.c.l.b16 %v648
        %v686 = vunpack.c.l.b16 %v649
        %v687 = vunpack.c.l.b16 %v650
        %v688 = vunpack.c.l.b16 %v651
        %v689 = vunpack.c.l.b16 %v652
        %v690 = vunpack.c.l.b16 %v653
        %v691 = vunpack.c.l.b16 %v654
        %v692 = vunpack.c.l.b16 %v655
        %v693 = vunpack.c.l.b16 %v656
        %v694 = vunpack.c.l.b16 %v657
        %v695 = vunpack.c.l.b16 %v658
        %v696 = vpack.c.b16 %v681, %v680
        %v697 = vpack.c.b16 %v683, %v682
        %v698 = vpack.c.b16 %v685, %v684
        %v699 = vpack.c.b16 %v687, %v686
        %v700 = vpack.c.b16 %v689, %v688
        %v701 = vpack.c.b16 %v691, %v690
        %v702 = vpack.c.b16 %v693, %v692
        %v703 = vpack.c.b16 %v695, %v694
        %712 = vmatprep.subr.bf16.mxu0 0
        %713 = vmatpush1.bf16.msra.mxu0 %v703
        %714 = vmatprep.subr.bf16.mxu0 0
        %715 = vmatpush1.bf16.msra.mxu0 %v702
        %716 = vmatprep.subr.bf16.mxu0 0
        %717 = vmatpush1.bf16.msra.mxu0 %v701
        %718 = vmatprep.subr.bf16.mxu0 0
        %719 = vmatpush1.bf16.msra.mxu0 %v700
        %720 = vmatprep.subr.bf16.mxu0 0
        %721 = vmatpush1.bf16.msra.mxu0 %v699
        %722 = vmatprep.subr.bf16.mxu0 0
        %723 = vmatpush1.bf16.msra.mxu0 %v698
        %724 = vmatprep.subr.bf16.mxu0 0
        %725 = vmatpush1.bf16.msra.mxu0 %v697
        %726 = vmatprep.subr.bf16.mxu0 0
        %727 = vmatpush1.bf16.msra.mxu0 %v696
        %728 = vmatprep.subr.bf16.mxu0 0
        %729 = vmatpush2.bf16.msra.mxu0 0
        %730 = vmatprep.subr.bf16.mxu0 0
        %731 = vmatpush2.bf16.msra.mxu0 0
        %732 = vmatprep.subr.bf16.mxu0 0
        %733 = vmatpush2.bf16.msra.mxu0 0
        %734 = vmatprep.subr.bf16.mxu0 0
        %735 = vmatpush2.bf16.msra.mxu0 0
        %736 = vmatprep.subr.bf16.mxu0 0
        %737 = vmatpush2.bf16.msra.mxu0 0
        %738 = vmatprep.subr.bf16.mxu0 0
        %739 = vmatpush2.bf16.msra.mxu0 0
        %740 = vmatprep.subr.bf16.mxu0 0
        %741 = vmatpush2.bf16.msra.mxu0 0
        %742 = vmatprep.subr.bf16.mxu0 0
        %743 = vmatpush2.bf16.msra.mxu0 0
        %744 = vmatprep.mubr.bf16.mxu0 0
        %745 = vmatmul.mubr.bf16.gmra.mxu0 %v641
        %v746 = vpop.f32.mrf.mxu0
        %v747 = vadd.f32 %v663, %v746
        %v748 = vpop.f32.mrf.mxu0
        %v749 = vpop.f32.mrf.mxu0
        %v750 = vadd.f32 %v663, %v749
        %v751 = vpop.f32.mrf.mxu0
        %752 = vdwg.mxu0
        %v753 = vtanh.pop %v747
        %v754 = vtanh.pop %v750
        %v755 = vpack.c.bf16 %v754, %v753
        %s756 = scalar_lea.vmem [#allocation2], 320
        %v757 = vld [vmem:[%s756] sm:$0xf]
        %v758 = vld [vmem:[%s756 + $0x4] sm:$0xf]
        %v759 = vld [vmem:[%s756 + $0x8] sm:$0xf]
        %v760 = vld [vmem:[%s756 + $0xc] sm:$0xf]
        %v761 = vld [vmem:[%s756 + $0x10] sm:$0xf]
        %v762 = vld [vmem:[%s756 + $0x14] sm:$0xf]
        %v763 = vld [vmem:[%s756 + $0x18] sm:$0xf]
        %v764 = vld [vmem:[%s756 + $0x1c] sm:$0xf]
        %v765 = vld [vmem:[%s756 + $0x20] sm:$0xf]
        %v766 = vld [vmem:[%s756 + $0x24] sm:$0xf]
        %v767 = vld [vmem:[%s756 + $0x28] sm:$0xf]
        %v768 = vld [vmem:[%s756 + $0x2c] sm:$0xf]
        %v769 = vld [vmem:[%s756 + $0x30] sm:$0xf]
        %v770 = vld [vmem:[%s756 + $0x34] sm:$0xf]
        %v771 = vld [vmem:[%s756 + $0x38] sm:$0xf]
        %v772 = vld [vmem:[%s756 + $0x3c] sm:$0xf]
        %v773 = vld [vmem:[%s2 + $0x5] sm:$0x1]
        %v774 = vlaneseq
        %v775 = vshrl.u32 %v774, 7
        %v776 = vsub.s32 0, %v775
        %v777 = vrot.slane %v773, %v776
        %v794 = vunpack.c.l.b16 %v757
        %v795 = vunpack.c.l.b16 %v758
        %v796 = vunpack.c.l.b16 %v759
        %v797 = vunpack.c.l.b16 %v760
        %v798 = vunpack.c.l.b16 %v761
        %v799 = vunpack.c.l.b16 %v762
        %v800 = vunpack.c.l.b16 %v763
        %v801 = vunpack.c.l.b16 %v764
        %v802 = vunpack.c.l.b16 %v765
        %v803 = vunpack.c.l.b16 %v766
        %v804 = vunpack.c.l.b16 %v767
        %v805 = vunpack.c.l.b16 %v768
        %v806 = vunpack.c.l.b16 %v769
        %v807 = vunpack.c.l.b16 %v770
        %v808 = vunpack.c.l.b16 %v771
        %v809 = vunpack.c.l.b16 %v772
        %v810 = vpack.c.b16 %v795, %v794
        %v811 = vpack.c.b16 %v797, %v796
        %v812 = vpack.c.b16 %v799, %v798
        %v813 = vpack.c.b16 %v801, %v800
        %v814 = vpack.c.b16 %v803, %v802
        %v815 = vpack.c.b16 %v805, %v804
        %v816 = vpack.c.b16 %v807, %v806
        %v817 = vpack.c.b16 %v809, %v808
        %826 = vmatprep.subr.bf16.mxu0 0
        %827 = vmatpush1.bf16.msra.mxu0 %v817
        %828 = vmatprep.subr.bf16.mxu0 0
        %829 = vmatpush1.bf16.msra.mxu0 %v816
        %830 = vmatprep.subr.bf16.mxu0 0
        %831 = vmatpush1.bf16.msra.mxu0 %v815
        %832 = vmatprep.subr.bf16.mxu0 0
        %833 = vmatpush1.bf16.msra.mxu0 %v814
        %834 = vmatprep.subr.bf16.mxu0 0
        %835 = vmatpush1.bf16.msra.mxu0 %v813
        %836 = vmatprep.subr.bf16.mxu0 0
        %837 = vmatpush1.bf16.msra.mxu0 %v812
        %838 = vmatprep.subr.bf16.mxu0 0
        %839 = vmatpush1.bf16.msra.mxu0 %v811
        %840 = vmatprep.subr.bf16.mxu0 0
        %841 = vmatpush1.bf16.msra.mxu0 %v810
        %842 = vmatprep.subr.bf16.mxu0 0
        %843 = vmatpush2.bf16.msra.mxu0 0
        %844 = vmatprep.subr.bf16.mxu0 0
        %845 = vmatpush2.bf16.msra.mxu0 0
        %846 = vmatprep.subr.bf16.mxu0 0
        %847 = vmatpush2.bf16.msra.mxu0 0
        %848 = vmatprep.subr.bf16.mxu0 0
        %849 = vmatpush2.bf16.msra.mxu0 0
        %850 = vmatprep.subr.bf16.mxu0 0
        %851 = vmatpush2.bf16.msra.mxu0 0
        %852 = vmatprep.subr.bf16.mxu0 0
        %853 = vmatpush2.bf16.msra.mxu0 0
        %854 = vmatprep.subr.bf16.mxu0 0
        %855 = vmatpush2.bf16.msra.mxu0 0
        %856 = vmatprep.subr.bf16.mxu0 0
        %857 = vmatpush2.bf16.msra.mxu0 0
        %858 = vmatprep.mubr.bf16.mxu0 0
        %859 = vmatmul.mubr.bf16.gmra.mxu0 %v755
        %v860 = vpop.f32.mrf.mxu0
        %v861 = vadd.f32 %v777, %v860
        %v862 = vpop.f32.mrf.mxu0
        %v863 = vpop.f32.mrf.mxu0
        %v864 = vadd.f32 %v777, %v863
        %v865 = vpop.f32.mrf.mxu0
        %866 = vdwg.mxu0
        %v867 = vtanh.pop %v861
        %v868 = vtanh.pop %v864
        %v869 = vpack.c.bf16 %v868, %v867
        %s870 = scalar_lea.vmem [#allocation2], 384
        %v871 = vld [vmem:[%s870] sm:$0xf]
        %v872 = vld [vmem:[%s870 + $0x4] sm:$0xf]
        %v873 = vld [vmem:[%s870 + $0x8] sm:$0xf]
        %v874 = vld [vmem:[%s870 + $0xc] sm:$0xf]
        %v875 = vld [vmem:[%s870 + $0x10] sm:$0xf]
        %v876 = vld [vmem:[%s870 + $0x14] sm:$0xf]
        %v877 = vld [vmem:[%s870 + $0x18] sm:$0xf]
        %v878 = vld [vmem:[%s870 + $0x1c] sm:$0xf]
        %v879 = vld [vmem:[%s870 + $0x20] sm:$0xf]
        %v880 = vld [vmem:[%s870 + $0x24] sm:$0xf]
        %v881 = vld [vmem:[%s870 + $0x28] sm:$0xf]
        %v882 = vld [vmem:[%s870 + $0x2c] sm:$0xf]
        %v883 = vld [vmem:[%s870 + $0x30] sm:$0xf]
        %v884 = vld [vmem:[%s870 + $0x34] sm:$0xf]
        %v885 = vld [vmem:[%s870 + $0x38] sm:$0xf]
        %v886 = vld [vmem:[%s870 + $0x3c] sm:$0xf]
        %v887 = vld [vmem:[%s2 + $0x6] sm:$0x1]
        %v888 = vlaneseq
        %v889 = vshrl.u32 %v888, 7
        %v890 = vsub.s32 0, %v889
        %v891 = vrot.slane %v887, %v890
        %v908 = vunpack.c.l.b16 %v871
        %v909 = vunpack.c.l.b16 %v872
        %v910 = vunpack.c.l.b16 %v873
        %v911 = vunpack.c.l.b16 %v874
        %v912 = vunpack.c.l.b16 %v875
        %v913 = vunpack.c.l.b16 %v876
        %v914 = vunpack.c.l.b16 %v877
        %v915 = vunpack.c.l.b16 %v878
        %v916 = vunpack.c.l.b16 %v879
        %v917 = vunpack.c.l.b16 %v880
        %v918 = vunpack.c.l.b16 %v881
        %v919 = vunpack.c.l.b16 %v882
        %v920 = vunpack.c.l.b16 %v883
        %v921 = vunpack.c.l.b16 %v884
        %v922 = vunpack.c.l.b16 %v885
        %v923 = vunpack.c.l.b16 %v886
        %v924 = vpack.c.b16 %v909, %v908
        %v925 = vpack.c.b16 %v911, %v910
        %v926 = vpack.c.b16 %v913, %v912
        %v927 = vpack.c.b16 %v915, %v914
        %v928 = vpack.c.b16 %v917, %v916
        %v929 = vpack.c.b16 %v919, %v918
        %v930 = vpack.c.b16 %v921, %v920
        %v931 = vpack.c.b16 %v923, %v922
        %940 = vmatprep.subr.bf16.mxu0 0
        %941 = vmatpush1.bf16.msra.mxu0 %v931
        %942 = vmatprep.subr.bf16.mxu0 0
        %943 = vmatpush1.bf16.msra.mxu0 %v930
        %944 = vmatprep.subr.bf16.mxu0 0
        %945 = vmatpush1.bf16.msra.mxu0 %v929
        %946 = vmatprep.subr.bf16.mxu0 0
        %947 = vmatpush1.bf16.msra.mxu0 %v928
        %948 = vmatprep.subr.bf16.mxu0 0
        %949 = vmatpush1.bf16.msra.mxu0 %v927
        %950 = vmatprep.subr.bf16.mxu0 0
        %951 = vmatpush1.bf16.msra.mxu0 %v926
        %952 = vmatprep.subr.bf16.mxu0 0
        %953 = vmatpush1.bf16.msra.mxu0 %v925
        %954 = vmatprep.subr.bf16.mxu0 0
        %955 = vmatpush1.bf16.msra.mxu0 %v924
        %956 = vmatprep.subr.bf16.mxu0 0
        %957 = vmatpush2.bf16.msra.mxu0 0
        %958 = vmatprep.subr.bf16.mxu0 0
        %959 = vmatpush2.bf16.msra.mxu0 0
        %960 = vmatprep.subr.bf16.mxu0 0
        %961 = vmatpush2.bf16.msra.mxu0 0
        %962 = vmatprep.subr.bf16.mxu0 0
        %963 = vmatpush2.bf16.msra.mxu0 0
        %964 = vmatprep.subr.bf16.mxu0 0
        %965 = vmatpush2.bf16.msra.mxu0 0
        %966 = vmatprep.subr.bf16.mxu0 0
        %967 = vmatpush2.bf16.msra.mxu0 0
        %968 = vmatprep.subr.bf16.mxu0 0
        %969 = vmatpush2.bf16.msra.mxu0 0
        %970 = vmatprep.subr.bf16.mxu0 0
        %971 = vmatpush2.bf16.msra.mxu0 0
        %972 = vmatprep.mubr.bf16.mxu0 0
        %973 = vmatmul.mubr.bf16.gmra.mxu0 %v869
        %v974 = vpop.f32.mrf.mxu0
        %v975 = vadd.f32 %v891, %v974
        %v976 = vpop.f32.mrf.mxu0
        %v977 = vpop.f32.mrf.mxu0
        %v978 = vadd.f32 %v891, %v977
        %v979 = vpop.f32.mrf.mxu0
        %980 = vdwg.mxu0
        %v981 = vtanh.pop %v975
        %v982 = vtanh.pop %v978
        %v983 = vpack.c.bf16 %v982, %v981
        %s984 = scalar_lea.vmem [#allocation2], 448
        %v985 = vld [vmem:[%s984] sm:$0xf]
        %v986 = vld [vmem:[%s984 + $0x4] sm:$0xf]
        %v987 = vld [vmem:[%s984 + $0x8] sm:$0xf]
        %v988 = vld [vmem:[%s984 + $0xc] sm:$0xf]
        %v989 = vld [vmem:[%s984 + $0x10] sm:$0xf]
        %v990 = vld [vmem:[%s984 + $0x14] sm:$0xf]
        %v991 = vld [vmem:[%s984 + $0x18] sm:$0xf]
        %v992 = vld [vmem:[%s984 + $0x1c] sm:$0xf]
        %v993 = vld [vmem:[%s984 + $0x20] sm:$0xf]
        %v994 = vld [vmem:[%s984 + $0x24] sm:$0xf]
        %v995 = vld [vmem:[%s984 + $0x28] sm:$0xf]
        %v996 = vld [vmem:[%s984 + $0x2c] sm:$0xf]
        %v997 = vld [vmem:[%s984 + $0x30] sm:$0xf]
        %v998 = vld [vmem:[%s984 + $0x34] sm:$0xf]
        %v999 = vld [vmem:[%s984 + $0x38] sm:$0xf]
        %v1000 = vld [vmem:[%s984 + $0x3c] sm:$0xf]
        %v1001 = vld [vmem:[%s2 + $0x7] sm:$0x1]
        %v1002 = vlaneseq
        %v1003 = vshrl.u32 %v1002, 7
        %v1004 = vsub.s32 0, %v1003
        %v1005 = vrot.slane %v1001, %v1004
        %v1022 = vunpack.c.l.b16 %v985
        %v1023 = vunpack.c.l.b16 %v986
        %v1024 = vunpack.c.l.b16 %v987
        %v1025 = vunpack.c.l.b16 %v988
        %v1026 = vunpack.c.l.b16 %v989
        %v1027 = vunpack.c.l.b16 %v990
        %v1028 = vunpack.c.l.b16 %v991
        %v1029 = vunpack.c.l.b16 %v992
        %v1030 = vunpack.c.l.b16 %v993
        %v1031 = vunpack.c.l.b16 %v994
        %v1032 = vunpack.c.l.b16 %v995
        %v1033 = vunpack.c.l.b16 %v996
        %v1034 = vunpack.c.l.b16 %v997
        %v1035 = vunpack.c.l.b16 %v998
        %v1036 = vunpack.c.l.b16 %v999
        %v1037 = vunpack.c.l.b16 %v1000
        %v1038 = vpack.c.b16 %v1023, %v1022
        %v1039 = vpack.c.b16 %v1025, %v1024
        %v1040 = vpack.c.b16 %v1027, %v1026
        %v1041 = vpack.c.b16 %v1029, %v1028
        %v1042 = vpack.c.b16 %v1031, %v1030
        %v1043 = vpack.c.b16 %v1033, %v1032
        %v1044 = vpack.c.b16 %v1035, %v1034
        %v1045 = vpack.c.b16 %v1037, %v1036
        %1054 = vmatprep.subr.bf16.mxu0 0
        %1055 = vmatpush1.bf16.msra.mxu0 %v1045
        %1056 = vmatprep.subr.bf16.mxu0 0
        %1057 = vmatpush1.bf16.msra.mxu0 %v1044
        %1058 = vmatprep.subr.bf16.mxu0 0
        %1059 = vmatpush1.bf16.msra.mxu0 %v1043
        %1060 = vmatprep.subr.bf16.mxu0 0
        %1061 = vmatpush1.bf16.msra.mxu0 %v1042
        %1062 = vmatprep.subr.bf16.mxu0 0
        %1063 = vmatpush1.bf16.msra.mxu0 %v1041
        %1064 = vmatprep.subr.bf16.mxu0 0
        %1065 = vmatpush1.bf16.msra.mxu0 %v1040
        %1066 = vmatprep.subr.bf16.mxu0 0
        %1067 = vmatpush1.bf16.msra.mxu0 %v1039
        %1068 = vmatprep.subr.bf16.mxu0 0
        %1069 = vmatpush1.bf16.msra.mxu0 %v1038
        %1070 = vmatprep.subr.bf16.mxu0 0
        %1071 = vmatpush2.bf16.msra.mxu0 0
        %1072 = vmatprep.subr.bf16.mxu0 0
        %1073 = vmatpush2.bf16.msra.mxu0 0
        %1074 = vmatprep.subr.bf16.mxu0 0
        %1075 = vmatpush2.bf16.msra.mxu0 0
        %1076 = vmatprep.subr.bf16.mxu0 0
        %1077 = vmatpush2.bf16.msra.mxu0 0
        %1078 = vmatprep.subr.bf16.mxu0 0
        %1079 = vmatpush2.bf16.msra.mxu0 0
        %1080 = vmatprep.subr.bf16.mxu0 0
        %1081 = vmatpush2.bf16.msra.mxu0 0
        %1082 = vmatprep.subr.bf16.mxu0 0
        %1083 = vmatpush2.bf16.msra.mxu0 0
        %1084 = vmatprep.subr.bf16.mxu0 0
        %1085 = vmatpush2.bf16.msra.mxu0 0
        %1086 = vmatprep.mubr.bf16.mxu0 0
        %1087 = vmatmul.mubr.bf16.gmra.mxu0 %v983
        %v1088 = vpop.f32.mrf.mxu0
        %v1089 = vadd.f32 %v1005, %v1088
        %v1090 = vpop.f32.mrf.mxu0
        %v1091 = vpop.f32.mrf.mxu0
        %v1092 = vadd.f32 %v1005, %v1091
        %v1093 = vpop.f32.mrf.mxu0
        %1094 = vdwg.mxu0
        %vm1095 = vcmask 130048
        %1096 = vst.msk [vmem:[%s187] sm:$0xff] %vm1095, %v1089
        %1097 = vst.msk [vmem:[%s187 + $0x8] sm:$0xff] %vm1095, %v1092
        %s1098 = smul.u32 2, %s15
        %p1099 = scmp.lt.s32.totalorder %s1098, 3
        %s1100 = scalar_select %p1099, %s1098, 3
        %s1101 = smul.addr %s1100, 8
        %s1102 = scalar_lea.vmem %s3, %s1101
        // Predicated region
        $region37: #{pinn_forward.1} parent=31 // pred_check
          %p1103 = pneg %p101
        $region38: #{pinn_forward.1} parent=31 // pred_check_branch
          %1105 = sbr.rel (%p1103) target = $region40
        $region39: #{pinn_forward.1} parent=31 // pred_region
          %s1106 = smul.u32 2, %s15
        $region40: #{pinn_forward.1} parent=31 // pred_fallthru
          _
      $region32: #{pinn_forward.1} parent=5 // pred_fallthru
        _
      %p1107 = scmp.le.s32.totalorder 2, %s10
      // Predicated region
      $region41: #{pinn_forward.1} parent=5 // pred_check
        %p1108 = pneg %p1107
      $region42: #{pinn_forward.1} parent=5 // pred_check_branch
        %1110 = sbr.rel (%p1108) target = $region44
      $region43: #{pinn_forward.1} parent=5 // pred_region
        %s1111 = ssub.s32 %s10, 2
        // Predicated region
        $region45: #{pinn_forward.1} parent=43 // pred_check
          %p1112 = pneg %p107
        $region46: #{pinn_forward.1} parent=43 // pred_check_branch
          %1114 = sbr.rel (%p1112) target = $region48
        $region47: #{pinn_forward.1} parent=43 // pred_region
          %s1115 = smul.u32 2, %s16
          %p1116 = scmp.lt.s32.totalorder %s1115, 3
          %s1117 = scalar_select %p1116, %s1115, 3
          %s1118 = smul.addr %s1117, 8
          %s1119 = scalar_lea.vmem %s3, %s1118
        $region48: #{pinn_forward.1} parent=43 // pred_fallthru
          _
      $region44: #{pinn_forward.1} parent=5 // pred_fallthru
        _
    $region6: #{pinn_forward.1} parent=1 // loop_footer
      %s14 = sadd.s32 1, %s10
    $region7: #{pinn_forward.1} parent=1 // loop_footer_branch
      %9 = sbr.rel target = $region3
    $region8: #{pinn_forward.1} parent=1 // loop_exit
      _
    %1120 = vsyncpa [#allocation3], 1
    %s1121 = scalar_lea.sflag [#allocation3], 1
    %1122 = vsyncpa %s1121, 1

</llo_original>
